<compile_context>
chip_gen: v6e
topology: v6e:2x2x1
jax: 0.10.0
libtpu: 0.0.40
codegen_flags: <defaults>
</compile_context>

<pallas_src>
import functools
import math

import jax
import jax.numpy as jnp
from jax.experimental import pallas as pl
from jax.experimental.pallas import tpu as pltpu


def _pos_enc_kernel(x_ref, o_ref, *, d_model: int, block_rows: int):
    """Adds sinusoidal positional encoding to one (block_rows, B*D) slab."""
    ts, bd = x_ref.shape

    # Column-dependent part (computed once per lane, on a single row):
    #   feature index d = col % d_model, frequency exp(2*(d//2) * -ln(1e4)/D),
    #   odd features take cos, even features take sin (PyTorch 0::2 / 1::2).
    col = jax.lax.broadcasted_iota(jnp.int32, (1, bd), 1)
    d = col % d_model
    d_even = (d - (d % 2)).astype(jnp.float32)          # == 2 * (d // 2)
    inv_freq = jnp.exp(d_even * (-math.log(10000.0) / d_model))   # (1, bd)
    use_cos = (d % 2) == 1                                        # (1, bd)

    # Row-dependent part: absolute sequence position of each sublane.
    row0 = pl.program_id(0) * block_rows
    pos = (row0 + jax.lax.broadcasted_iota(jnp.int32, (ts, 1), 0)
           ).astype(jnp.float32)                                  # (ts, 1)

    angle = pos * inv_freq                                        # (ts, bd) f32
    pe = jnp.where(use_cos, jnp.cos(angle), jnp.sin(angle))       # float32

    # Match PyTorch promotion (x + float32 pe), then cast to the output dtype.
    o_ref[...] = (x_ref[...].astype(jnp.float32) + pe).astype(o_ref.dtype)
    # TODO(synk): train-mode dropout (Bernoulli mask + 1/(1-p) scaling via
    # pltpu.prng_random_bits) is intentionally omitted -- Inference.py is eval().


def make_pe_table(d_model: int, max_len: int = 5000) -> jnp.ndarray:
    """Pure-JAX sinusoidal table identical to the PyTorch buffer (reference only)."""
    position = jnp.arange(0, max_len, dtype=jnp.float32)[:, None]        # (L, 1)
    div_term = jnp.exp(
        jnp.arange(0, d_model, 2, dtype=jnp.float32)
        * (-math.log(10000.0) / d_model)
    )                                                                    # (D/2,)
    angles = position * div_term                                         # (L, D/2)
    pe = jnp.zeros((max_len, d_model), dtype=jnp.float32)
    pe = pe.at[:, 0::2].set(jnp.sin(angles))
    pe = pe.at[:, 1::2].set(jnp.cos(angles))
    return pe[:, None, :]                                                # (L, 1, D)


def positional_encoding(x: jnp.ndarray, max_len: int = 5000,
                        block_bytes: int = 2 * 1024 * 1024) -> jnp.ndarray:
    """x: (S, B, D) -> x + pe[:S]  (eval-mode PositionalEncoding forward)."""
    S, B, D = x.shape
    assert D % 2 == 0, "d_model must be even (same constraint as the PyTorch module)"
    assert S <= max_len, f"sequence length {S} exceeds max_len {max_len}"

    BD = B * D
    itemsize = jnp.dtype(x.dtype).itemsize
    # Rows per block: ~block_bytes worth of x, a multiple of 8 (sublane), or
    # the full S.  2 MiB blocks x double-buffered x (in + out) stays well under
    # the scoped VMEM limit on all generations, including v7x's 64 MiB VMEM.
    rows = max(8, (block_bytes // (BD * itemsize)) // 8 * 8)
    ts = min(S, rows)  # either the full extent S, or a multiple of 8

    x2d = x.reshape(S, BD)

    out2d = pl.pallas_call(
        functools.partial(_pos_enc_kernel, d_model=D, block_rows=ts),
        out_shape=jax.ShapeDtypeStruct((S, BD), x.dtype),
        grid_spec=pltpu.PrefetchScalarGridSpec(
            num_scalar_prefetch=0,
            grid=(pl.cdiv(S, ts),),
            in_specs=[pl.BlockSpec((ts, BD), lambda i: (i, 0))],
            out_specs=pl.BlockSpec((ts, BD), lambda i: (i, 0)),
        ),
        compiler_params=pltpu.CompilerParams(
            # Elementwise with no cross-step dependence: lets v7x shard the
            # S-tiles across both TensorCores; harmless on v5e/v6e.
            dimension_semantics=("parallel",),
        ),
    )(x2d)

    return out2d.reshape(S, B, D)


if __name__ == "__main__":
    seq_len, batch, d_model = 8, 2, 32
    max_len = 64  # small, deterministic table for the reference check

    key = jax.random.PRNGKey(0)
    x = jax.random.normal(key, (seq_len, batch, d_model), dtype=jnp.float32)

    out = jax.block_until_ready(positional_encoding(x, max_len=max_len))

    # Sanity check against a pure-JAX reference (table-based, like PyTorch).
    ref = x + make_pe_table(d_model, max_len=max_len)[:seq_len]
    assert out.shape == (seq_len, batch, d_model)
    assert jnp.allclose(out, ref, atol=1e-4, rtol=1e-4), "mismatch vs reference"

    print("KERNEL_OK")
</pallas_src>

<mosaic_0001>
module attributes {stable_mosaic.version = 11 : i64} {
  func.func @_pos_enc_kernel(%arg0: i32, %arg1: memref<8x64xf32, #tpu.memory_space<vmem>>, %arg2: memref<8x64xf32, #tpu.memory_space<vmem>>) attributes {dimension_semantics = [#tpu.dimension_semantics<parallel>], iteration_bounds = array<i64: 1>, scalar_prefetch = 0 : i64, scratch_operands = 0 : i64, tpu.core_type = #tpu.core_type<tc>, window_params = [{transform_indices = @transform_0, window_bounds = array<i64: 8, 64>}, {transform_indices = @transform_1, window_bounds = array<i64: 8, 64>}]} {
    %0 = tpu.iota {dimensions = array<i32: 1>} : vector<1x64xi32>
    %c32_i32 = arith.constant 32 : i32
    %c0_i32 = arith.constant 0 : i32
    %1 = arith.cmpi eq, %c32_i32, %c0_i32 : i32
    %c1_i32 = arith.constant 1 : i32
    %2 = arith.select %1, %c1_i32, %c32_i32 : i32
    %3 = vector.broadcast %2 : i32 to vector<1x64xi32>
    %4 = arith.remsi %0, %3 : vector<1x64xi32>
    %c0_i32_0 = arith.constant 0 : i32
    %5 = vector.broadcast %c0_i32_0 : i32 to vector<1x64xi32>
    %6 = arith.cmpi ne, %4, %5 : vector<1x64xi32>
    %c0_i32_1 = arith.constant 0 : i32
    %7 = vector.broadcast %c0_i32_1 : i32 to vector<1x64xi32>
    %8 = arith.cmpi slt, %4, %7 : vector<1x64xi32>
    %c0_i32_2 = arith.constant 0 : i32
    %9 = arith.cmpi slt, %2, %c0_i32_2 : i32
    %10 = vector.broadcast %9 : i1 to vector<1x64xi1>
    %11 = vector.broadcast %10 : vector<1x64xi1> to vector<1x64xi1>
    %12 = arith.xori %8, %11 : vector<1x64xi1>
    %13 = arith.andi %12, %6 : vector<1x64xi1>
    %14 = vector.broadcast %2 : i32 to vector<1x64xi32>
    %15 = arith.addi %4, %14 : vector<1x64xi32>
    %16 = arith.select %13, %15, %4 : vector<1x64xi1>, vector<1x64xi32>
    %c2_i32 = arith.constant 2 : i32
    %c0_i32_3 = arith.constant 0 : i32
    %17 = arith.cmpi eq, %c2_i32, %c0_i32_3 : i32
    %c1_i32_4 = arith.constant 1 : i32
    %18 = arith.select %17, %c1_i32_4, %c2_i32 : i32
    %19 = vector.broadcast %18 : i32 to vector<1x64xi32>
    %20 = arith.remsi %16, %19 : vector<1x64xi32>
    %c0_i32_5 = arith.constant 0 : i32
    %21 = vector.broadcast %c0_i32_5 : i32 to vector<1x64xi32>
    %22 = arith.cmpi ne, %20, %21 : vector<1x64xi32>
    %c0_i32_6 = arith.constant 0 : i32
    %23 = vector.broadcast %c0_i32_6 : i32 to vector<1x64xi32>
    %24 = arith.cmpi slt, %20, %23 : vector<1x64xi32>
    %c0_i32_7 = arith.constant 0 : i32
    %25 = arith.cmpi slt, %18, %c0_i32_7 : i32
    %26 = vector.broadcast %25 : i1 to vector<1x64xi1>
    %27 = vector.broadcast %26 : vector<1x64xi1> to vector<1x64xi1>
    %28 = arith.xori %24, %27 : vector<1x64xi1>
    %29 = arith.andi %28, %22 : vector<1x64xi1>
    %30 = vector.broadcast %18 : i32 to vector<1x64xi32>
    %31 = arith.addi %20, %30 : vector<1x64xi32>
    %32 = arith.select %29, %31, %20 : vector<1x64xi1>, vector<1x64xi32>
    %33 = arith.subi %16, %32 : vector<1x64xi32>
    %34 = arith.sitofp %33 : vector<1x64xi32> to vector<1x64xf32>
    %cst = arith.constant -0.287823141 : f32
    %35 = vector.broadcast %cst : f32 to vector<1x64xf32>
    %36 = arith.mulf %34, %35 : vector<1x64xf32>
    %37 = math.exp %36 : vector<1x64xf32>
    %c2_i32_8 = arith.constant 2 : i32
    %c0_i32_9 = arith.constant 0 : i32
    %38 = arith.cmpi eq, %c2_i32_8, %c0_i32_9 : i32
    %c1_i32_10 = arith.constant 1 : i32
    %39 = arith.select %38, %c1_i32_10, %c2_i32_8 : i32
    %40 = vector.broadcast %39 : i32 to vector<1x64xi32>
    %41 = arith.remsi %16, %40 : vector<1x64xi32>
    %c0_i32_11 = arith.constant 0 : i32
    %42 = vector.broadcast %c0_i32_11 : i32 to vector<1x64xi32>
    %43 = arith.cmpi ne, %41, %42 : vector<1x64xi32>
    %c0_i32_12 = arith.constant 0 : i32
    %44 = vector.broadcast %c0_i32_12 : i32 to vector<1x64xi32>
    %45 = arith.cmpi slt, %41, %44 : vector<1x64xi32>
    %c0_i32_13 = arith.constant 0 : i32
    %46 = arith.cmpi slt, %39, %c0_i32_13 : i32
    %47 = vector.broadcast %46 : i1 to vector<1x64xi1>
    %48 = vector.broadcast %47 : vector<1x64xi1> to vector<1x64xi1>
    %49 = arith.xori %45, %48 : vector<1x64xi1>
    %50 = arith.andi %49, %43 : vector<1x64xi1>
    %51 = vector.broadcast %39 : i32 to vector<1x64xi32>
    %52 = arith.addi %41, %51 : vector<1x64xi32>
    %53 = arith.select %50, %52, %41 : vector<1x64xi1>, vector<1x64xi32>
    %c1_i32_14 = arith.constant 1 : i32
    %54 = vector.broadcast %c1_i32_14 : i32 to vector<1x64xi32>
    %55 = arith.cmpi eq, %53, %54 : vector<1x64xi32>
    %c8_i32 = arith.constant 8 : i32
    %56 = arith.muli %arg0, %c8_i32 : i32
    %57 = tpu.iota {dimensions = array<i32: 0>} : vector<8x1xi32>
    %58 = vector.broadcast %56 : i32 to vector<8x1xi32>
    %59 = arith.addi %58, %57 : vector<8x1xi32>
    %60 = arith.sitofp %59 : vector<8x1xi32> to vector<8x1xf32>
    %61 = vector.broadcast %60 : vector<8x1xf32> to vector<8x64xf32>
    %62 = vector.broadcast %37 : vector<1x64xf32> to vector<8x64xf32>
    %63 = arith.mulf %61, %62 : vector<8x64xf32>
    %64 = math.cos %63 : vector<8x64xf32>
    %65 = math.sin %63 : vector<8x64xf32>
    %66 = vector.shape_cast %55 : vector<1x64xi1> to vector<1x64xi1>
    %67 = vector.broadcast %66 : vector<1x64xi1> to vector<8x64xi1>
    %68 = arith.select %67, %64, %65 : vector<8x64xi1>, vector<8x64xf32>
    %c0 = arith.constant 0 : index
    %c0_15 = arith.constant 0 : index
    %69 = vector.load %arg1[%c0, %c0_15] : memref<8x64xf32, #tpu.memory_space<vmem>>, vector<8x64xf32>
    %70 = arith.addf %69, %68 : vector<8x64xf32>
    %c0_16 = arith.constant 0 : index
    %c0_17 = arith.constant 0 : index
    %71 = vector.load %arg2[%c0_16, %c0_17] : memref<8x64xf32, #tpu.memory_space<vmem>>, vector<8x64xf32>
    tpu.vector_store %arg2[%c0_16, %c0_17], %70 {strides = array<i32>} : memref<8x64xf32, #tpu.memory_space<vmem>>, vector<8x64xf32>,
    return
  }
  func.func @transform_0(%arg0: i32) -> (i32, i32) {
    %c0_i32 = arith.constant 0 : i32
    %c0_i32_0 = arith.constant 0 : i32
    return %arg0, %c0_i32 : i32, i32
  }
  func.func @transform_1(%arg0: i32) -> (i32, i32) {
    %c0_i32 = arith.constant 0 : i32
    %c0_i32_0 = arith.constant 0 : i32
    return %arg0, %c0_i32 : i32, i32
  }
}

</mosaic_0001>

<llo_original>
// kernel: tpu_custom_call.1
$region0: #{tpu_custom_call.1}
  #allocation0 [shape = 'u32[]', space=smem, size = 0x4, offset = 0x4, fixed_abs, tag = 'smem constant byte address 0x4 - core index']
  #allocation1 [shape = 'u32[144,128]{1,0:T(1,128)}', space=vmem, size = 0x12000, scoped, tag = 'internal scratch']
  %s0 = inlined_call_operand.hbm [shape: f32[8,64], index: 0, kind: input, shape index: {}]
  %s1 = inlined_call_operand.hbm [shape: f32[8,64], index: 1, kind: output, shape index: {}]
  %s2 = sld [smem:[#allocation0]]
  $region18: #{tpu_custom_call.1} parent=0
    _
  %s4 = ssub.s32 1, %s2
  %s5 = scalar_select 0, %s4, %s2
  $region1: #{tpu_custom_call.1} parent=0
    #allocation2 [shape = 'u8[4096]{0}', space=vmem, size = 0x1000, scoped, tag = 'input window, operand 0, single buffered']
    #allocation3 [shape = 's32[1]{0}', space=sflag, size = 0x4, scoped, tag = 'scoped memory for tpu_custom_call.1']
    #allocation4 [shape = 's32[1]{0}', space=sflag, size = 0x4, scoped, tag = 'scoped memory for tpu_custom_call.1']
    #allocation5 [shape = 'u8[4096]{0}', space=vmem, size = 0x1000, scoped, tag = 'output window, operand 0, single buffered']
    %6 = vsyncpa [#allocation3], 0
    %7 = vsyncpa [#allocation4], 0
    // Predicated region
    $region2: #{tpu_custom_call.1} parent=1 // pred_check
      _
    $region3: #{tpu_custom_call.1} parent=1 // pred_check_branch
      %9 = sbr.rel (0) target = $region5
    $region4: #{tpu_custom_call.1} parent=1 // pred_region
      %s11 = ssub.s32 128, 128
      %12 = vsyncadd [#allocation3], %s11
      %s14 = sshll.u32 [#allocation2], 4
      %s15 = int_to_ptr.vmem [resolvable:$true] %s14
      %17 = dma.hbm_to_vmem [thread:$0]  %s0, 128, %s15, [#allocation3]
    $region5: #{tpu_custom_call.1} parent=1 // pred_fallthru
      _
    // Predicated region
    $region6: #{tpu_custom_call.1} parent=1 // pred_check
      _
    $region7: #{tpu_custom_call.1} parent=1 // pred_check_branch
      %19 = sbr.rel (0) target = $region9
    $region8: #{tpu_custom_call.1} parent=1 // pred_region
      %20 = dma.done [#allocation3], 128
    $region9: #{tpu_custom_call.1} parent=1 // pred_fallthru
      _
    %v21 = vlaneseq
    %v22 = vand.u32 %v21, 127
    %vm23 = vcmp.lt.s32.totalorder %v22, 0
    %v24 = vsub.s32 0, %v22
    %v25 = vsel %vm23, %v24, %v22
    %v26 = vshrl.u32 %v25, 5
    %v27 = vand.u32 %v25, 31
    %v28 = vsub.s32 0, %v27
    %v29 = vsel %vm23, %v28, %v27
    %vm30 = vcmp.ne.s32.totalorder %v29, 0
    %vm31 = vcmp.lt.s32.totalorder %v29, 0
    %vm32 = vmand %vm31, %vm30
    %v33 = vadd.s32 %v29, 32
    %v34 = vsel %vm32, %v33, %v29
    %vm35 = vcmp.lt.s32.totalorder %v34, 0
    %v36 = vsub.s32 0, %v34
    %v37 = vsel %vm35, %v36, %v34
    %v38 = vshrl.u32 %v37, 1
    %v39 = vand.u32 %v37, 1
    %v40 = vsub.s32 0, %v39
    %v41 = vsel %vm35, %v40, %v39
    %vm42 = vcmp.ne.s32.totalorder %v41, 0
    %vm43 = vcmp.lt.s32.totalorder %v41, 0
    %vm44 = vmand %vm43, %vm42
    %v45 = vadd.s32 %v41, 2
    %v46 = vsel %vm44, %v45, %v41
    %v47 = vsub.s32 %v34, %v46
    %v48 = vcvt.s32.f32 %v47
    %v49 = vmul.f32 %v48, -0.28782314
    %v50 = vmul.f32 %v49, 1.442695
    %v51 = vpow.pop %v50
    %vm52 = vcmp.eq.s32.totalorder %v46, 1
    %s53 = smul.u32 0, 8
    %v54 = vlaneseq
    %v55 = vshrl.u32 %v54, 7
    %v56 = vstv %s53
    %v57 = vadd.s32 %v56, %v55
    %v58 = vcvt.s32.f32 %v57
    %v59 = vmul.f32 %v58, %v51
    %v60 = vand.u32 2147483647, %v59
    %vm61 = vcmp.le.f32.partialorder %v60, 0.7853982
    %vm62 = vcmp.lt.s32.totalorder %v59, 0
    %v63 = vand.u32 %v59, 2139095040
    %v64 = vshrl.u32 %v63, 23
    %v65 = vsub.s32 %v64, 127
    %v66 = vand.u32 2147483647, %v59
    %v67 = vand.u32 %v66, 8388607
    %v68 = vor.u32 %v67, 8388608
    %v69 = vsub.s32 0, %v68
    %v70 = vadd.s32 %v65, 1
    %vm71 = vcmp.gt.s32.totalorder %v70, 0
    %v72 = vsel %vm71, %v70, 0
    %v73 = vshrl.u32 %v72, 5
    %v74 = vand.u32 %v72, 31
    %v75 = vsub.s32 32, %v74
    %v76 = vshrl.u32 683565275, %v75
    %v77 = vshll.u32 683565275, %v74
    %v78 = vshrl.u32 2475754826, %v75
    %v79 = vor.u32 %v77, %v78
    %v80 = vshll.u32 2475754826, %v74
    %v81 = vshrl.u32 2131351028, %v75
    %v82 = vor.u32 %v80, %v81
    %v83 = vshll.u32 2131351028, %v74
    %v84 = vshrl.u32 2102212464, %v75
    %v85 = vor.u32 %v83, %v84
    %v86 = vshll.u32 2102212464, %v74
    %v87 = vshrl.u32 920167782, %v75
    %v88 = vor.u32 %v86, %v87
    %v89 = vshll.u32 920167782, %v74
    %v90 = vshrl.u32 1326507024, %v75
    %v91 = vor.u32 %v89, %v90
    %vm92 = vcmp.lt.s32.totalorder %v73, 1
    %vm93 = vcmp.lt.s32.totalorder %v73, 2
    %vm94 = vcmp.lt.s32.totalorder %v73, 3
    %vm95 = vcmp.lt.s32.totalorder %v73, 4
    %v96 = vsel %vm92, %v76, %v79
    %v97 = vsel %vm95, %v85, 2102212464
    %v98 = vsel %vm94, %v82, %v97
    %v99 = vsel %vm93, %v96, %v98
    %v100 = vsel %vm92, %v79, %v82
    %v101 = vsel %vm95, %v88, 920167782
    %v102 = vsel %vm94, %v85, %v101
    %v103 = vsel %vm93, %v100, %v102
    %v104 = vsel %vm92, %v82, %v85
    %v105 = vsel %vm95, %v91, 1326507024
    %v106 = vsel %vm94, %v88, %v105
    %v107 = vsel %vm93, %v104, %v106
    %v108 = vshll.u32 %v68, 8
    %v109 = vmul.u32.u64.compose %v108, %v107
    %v110 = vextract.low.u32 %v109
    %v111 = vextract.high.u32 %v109
    %v112 = vmul.u32.u64.compose %v108, %v103
    %v113 = vextract.low.u32 %v112
    %v114 = vextract.high.u32 %v112
    %v115 = vmul.u32 %v108, %v99
    %v116 = vadd.s32 %v111, %v113
    %vm117 = vc.u32 %v111, %v113
    %v118 = vadd.s32 %v114, 1
    %v119 = vsel %vm117, %v118, %v114
    %v120 = vadd.s32 %v115, %v119
    %v121 = vadd.s32 %v120, 536870912
    %v122 = vshrl.u32 %v121, 30
    %v123 = vshll.u32 %v122, 30
    %v124 = vsub.s32 %v120, %v123
    %vm125 = vcmp.lt.s32.totalorder %v124, 0
    %v126 = vsub.s32 0, %v124
    %v127 = vsel %vm125, %v126, %v124
    %v128 = vclz %v127
    %v129 = vsub.s32 %v128, 2
    %vm130 = vcmp.gt.s32.totalorder 0, %v129
    %v131 = vsel %vm130, 0, %v129
    %v132 = vsub.s32 32, %v131
    %v133 = vshll.u32 %v124, %v131
    %v134 = vshrl.u32 %v116, %v132
    %v135 = vor.u32 %v133, %v134
    %v136 = vsub.s32 4294967266, %v131
    %v137 = vadd.s32 %v136, 127
    %v138 = vshll.u32 %v137, 23
    %v139 = vor.u32 4788187, %v138
    %v140 = vand.u32 2147483647, %v139
    %v142 = vcvt.s32.f32 %v135
    %v143 = vmul.f32 %v142, %v140
    %v144 = vxor.u32 %v143, 2147483648
    %v145 = vsel %vm62, %v144, %v143
    %v146 = vsub.s32 4, %v122
    %v147 = vsel %vm62, %v146, %v122
    %v148 = vsel %vm61, %v59, %v145
    %v149 = vsel %vm61, 0, %v147
    %v150 = vcosq.f32.pop %v148
    %v151 = vsinq.f32.pop %v148
    %vm152 = vweird.f32 %v59
    %v153 = vand.u32 %v149, 3
    %vm154 = vcmp.lt.s32.totalorder %v153, 2
    %vm155 = vcmp.eq.s32.totalorder %v153, 0
    %v156 = vxor.u32 %v151, 2147483648
    %v157 = vsel %vm155, %v150, %v156
    %vm158 = vcmp.eq.s32.totalorder %v153, 2
    %v159 = vxor.u32 %v150, 2147483648
    %v160 = vsel %vm158, %v159, %v151
    %v161 = vsel %vm154, %v157, %v160
    %v162 = vsel %vm152, nan, %v161
    %v163 = vand.u32 2147483647, %v59
    %vm164 = vcmp.le.f32.partialorder %v163, 0.7853982
    %vm165 = vcmp.lt.s32.totalorder %v59, 0
    %v166 = vand.u32 %v59, 2139095040
    %v167 = vshrl.u32 %v166, 23
    %v168 = vsub.s32 %v167, 127
    %v169 = vand.u32 2147483647, %v59
    %v170 = vand.u32 %v169, 8388607
    %v171 = vor.u32 %v170, 8388608
    %v172 = vsub.s32 0, %v171
    %v173 = vadd.s32 %v168, 1
    %vm174 = vcmp.gt.s32.totalorder %v173, 0
    %v175 = vsel %vm174, %v173, 0
    %v176 = vshrl.u32 %v175, 5
    %v177 = vand.u32 %v175, 31
    %v178 = vsub.s32 32, %v177
    %v179 = vshrl.u32 683565275, %v178
    %v180 = vshll.u32 683565275, %v177
    %v181 = vshrl.u32 2475754826, %v178
    %v182 = vor.u32 %v180, %v181
    %v183 = vshll.u32 2475754826, %v177
    %v184 = vshrl.u32 2131351028, %v178
    %v185 = vor.u32 %v183, %v184
    %v186 = vshll.u32 2131351028, %v177
    %v187 = vshrl.u32 2102212464, %v178
    %v188 = vor.u32 %v186, %v187
    %v189 = vshll.u32 2102212464, %v177
    %v190 = vshrl.u32 920167782, %v178
    %v191 = vor.u32 %v189, %v190
    %v192 = vshll.u32 920167782, %v177
    %v193 = vshrl.u32 1326507024, %v178
    %v194 = vor.u32 %v192, %v193
    %vm195 = vcmp.lt.s32.totalorder %v176, 1
    %vm196 = vcmp.lt.s32.totalorder %v176, 2
    %vm197 = vcmp.lt.s32.totalorder %v176, 3
    %vm198 = vcmp.lt.s32.totalorder %v176, 4
    %v199 = vsel %vm195, %v179, %v182
    %v200 = vsel %vm198, %v188, 2102212464
    %v201 = vsel %vm197, %v185, %v200
    %v202 = vsel %vm196, %v199, %v201
    %v203 = vsel %vm195, %v182, %v185
    %v204 = vsel %vm198, %v191, 920167782
    %v205 = vsel %vm197, %v188, %v204
    %v206 = vsel %vm196, %v203, %v205
    %v207 = vsel %vm195, %v185, %v188
    %v208 = vsel %vm198, %v194, 1326507024
    %v209 = vsel %vm197, %v191, %v208
    %v210 = vsel %vm196, %v207, %v209
    %v211 = vshll.u32 %v171, 8
    %v212 = vmul.u32.u64.compose %v211, %v210
    %v213 = vextract.low.u32 %v212
    %v214 = vextract.high.u32 %v212
    %v215 = vmul.u32.u64.compose %v211, %v206
    %v216 = vextract.low.u32 %v215
    %v217 = vextract.high.u32 %v215
    %v218 = vmul.u32 %v211, %v202
    %v219 = vadd.s32 %v214, %v216
    %vm220 = vc.u32 %v214, %v216
    %v221 = vadd.s32 %v217, 1
    %v222 = vsel %vm220, %v221, %v217
    %v223 = vadd.s32 %v218, %v222
    %v224 = vadd.s32 %v223, 536870912
    %v225 = vshrl.u32 %v224, 30
    %v226 = vshll.u32 %v225, 30
    %v227 = vsub.s32 %v223, %v226
    %vm228 = vcmp.lt.s32.totalorder %v227, 0
    %v229 = vsub.s32 0, %v227
    %v230 = vsel %vm228, %v229, %v227
    %v231 = vclz %v230
    %v232 = vsub.s32 %v231, 2
    %vm233 = vcmp.gt.s32.totalorder 0, %v232
    %v234 = vsel %vm233, 0, %v232
    %v235 = vsub.s32 32, %v234
    %v236 = vshll.u32 %v227, %v234
    %v237 = vshrl.u32 %v219, %v235
    %v238 = vor.u32 %v236, %v237
    %v239 = vsub.s32 4294967266, %v234
    %v240 = vadd.s32 %v239, 127
    %v241 = vshll.u32 %v240, 23
    %v242 = vor.u32 4788187, %v241
    %v243 = vand.u32 2147483647, %v242
    %v245 = vcvt.s32.f32 %v238
    %v246 = vmul.f32 %v245, %v243
    %v247 = vxor.u32 %v246, 2147483648
    %v248 = vsel %vm165, %v247, %v246
    %v249 = vsub.s32 4, %v225
    %v250 = vsel %vm165, %v249, %v225
    %v251 = vsel %vm164, %v59, %v248
    %v252 = vsel %vm164, 0, %v250
    %v253 = vcosq.f32.pop %v251
    %v254 = vsinq.f32.pop %v251
    %vm255 = vweird.f32 %v59
    %v256 = vadd.s32 %v252, 3
    %v257 = vand.u32 %v256, 3
    %vm258 = vcmp.lt.s32.totalorder %v257, 2
    %vm259 = vcmp.eq.s32.totalorder %v257, 0
    %v260 = vxor.u32 %v254, 2147483648
    %v261 = vsel %vm259, %v253, %v260
    %vm262 = vcmp.eq.s32.totalorder %v257, 2
    %v263 = vxor.u32 %v253, 2147483648
    %v264 = vsel %vm262, %v263, %v254
    %v265 = vsel %vm258, %v261, %v264
    %v266 = vsel %vm255, nan, %v265
    %v267 = vsel %vm52, 1, 0
    %vm268 = vcmp.eq.s32.totalorder %v267, 1
    %v269 = vsel %vm268, %v162, %v266
    %v270 = vld [vmem:[#allocation2] sm:$0xff]
    %v271 = vadd.f32 %v270, %v269
    %vm272 = vcmask 523264
    %273 = vst.msk [vmem:[#allocation5] sm:$0xff] %vm272, %v271
    // Predicated region
    $region10: #{tpu_custom_call.1} parent=1 // pred_check
      _
    $region11: #{tpu_custom_call.1} parent=1 // pred_check_branch
      %275 = sbr.rel (0) target = $region13
    $region12: #{tpu_custom_call.1} parent=1 // pred_region
      %s277 = ssub.s32 128, 128
      %278 = vsyncadd [#allocation4], %s277
      %s280 = sshll.u32 [#allocation5], 4
      %s281 = int_to_ptr.vmem [resolvable:$true] %s280
      %283 = dma.vmem_to_hbm [thread:$0]  %s281, 128, %s1, [#allocation4]
    $region13: #{tpu_custom_call.1} parent=1 // pred_fallthru
      _
    // Predicated region
    $region14: #{tpu_custom_call.1} parent=1 // pred_check
      _
    $region15: #{tpu_custom_call.1} parent=1 // pred_check_branch
      %285 = sbr.rel (0) target = $region17
    $region16: #{tpu_custom_call.1} parent=1 // pred_region
      %286 = dma.done [#allocation4], 128
    $region17: #{tpu_custom_call.1} parent=1 // pred_fallthru
      _
    %287 = vsyncpa [#allocation3], 1
    %288 = vsyncpa [#allocation4], 1

</llo_original>
